<compile_context>
chip_gen: v7x
topology: tpu7x:2x2x1
jax: 0.10.0
libtpu: 0.0.40
codegen_flags: <defaults>
</compile_context>

<pallas_src>
import functools

import jax
import jax.numpy as jnp
from jax.experimental import pallas as pl
from jax.experimental.pallas import tpu as pltpu


# ----------------------------- Pallas kernel ----------------------------------------


def _gdn_kernel(x_ref, gamma_ref, beta_ref, out_ref, *, inverse):
    x = x_ref[...]                                           # (C8, TP) f32
    sq = (x * x).astype(jnp.bfloat16)                        # bf16 MXU operand
    # norm[i, p] = sum_j gamma[i, j] * x[j, p]^2   ==  gamma @ sq
    norm = jnp.dot(gamma_ref[...], sq, preferred_element_type=jnp.float32)
    norm = norm + beta_ref[...]                              # (C8, 1) lane-broadcast
    if inverse:                                              # IGDN
        scale = jnp.sqrt(norm)
    else:                                                    # GDN
        scale = jax.lax.rsqrt(norm)
    out_ref[...] = (x * scale).astype(out_ref.dtype)


# ----------------------------- wrapper ------------------------------------------------


def _round_up(a, b):
    return (a + b - 1) // b * b


@functools.partial(jax.jit, static_argnames=("inverse", "tile_pixels"))
def gdn_forward(x_nchw, beta, gamma, *, inverse=False, tile_pixels=2048):
    """GDN forward.  x_nchw: (N, C, H, W); beta: (C,); gamma: (C, C) raw parameters."""
    N, C, H, W = x_nchw.shape
    HW = H * W

    # --- NonNegativeParametrizer forward (parameter setup, negligible FLOPs) --------
    ped = (2.0 ** -18) ** 2
    beta_eff = jnp.maximum(beta.astype(jnp.float32), (1e-6 + ped) ** 0.5) ** 2 - ped
    gamma_eff = jnp.maximum(gamma.astype(jnp.float32), ped ** 0.5) ** 2 - ped  # (C, C)

    # --- layout: (N, C, H*W), pixels on the lane axis --------------------------------
    C8 = _round_up(C, 8)                                  # sublane-align channels
    TP = min(_round_up(tile_pixels, 128), _round_up(HW, 128))
    HWp = _round_up(HW, TP)

    x3 = x_nchw.reshape(N, C, HW).astype(jnp.float32)     # free reshape if contiguous
    if C8 != C or HWp != HW:
        # Padded channels get beta=1 and zero gamma rows/cols; padded pixels are zero,
        # so every padded output element is exactly 0 (no NaNs/Infs).
        x3 = jnp.pad(x3, ((0, 0), (0, C8 - C), (0, HWp - HW)))
    gamma_b = jnp.pad(gamma_eff, ((0, C8 - C), (0, C8 - C))).astype(jnp.bfloat16)
    beta_b = jnp.pad(beta_eff, (0, C8 - C), constant_values=1.0).reshape(C8, 1)

    grid = (N, HWp // TP)
    cost = pl.CostEstimate(
        flops=2 * N * HWp * C8 * C8 + 4 * N * HWp * C8,
        transcendentals=N * HWp * C8,
        bytes_accessed=2 * N * C8 * HWp * 4 + C8 * C8 * 2 + C8 * 4,
    )

    out = pl.pallas_call(
        functools.partial(_gdn_kernel, inverse=inverse),
        out_shape=jax.ShapeDtypeStruct((N, C8, HWp), x_nchw.dtype),
        grid=grid,
        in_specs=[
            pl.BlockSpec((None, C8, TP), lambda n, t: (n, 0, t)),   # x tile (C8, TP)
            pl.BlockSpec((C8, C8), lambda n, t: (0, 0)),            # gamma (bf16, resident)
            pl.BlockSpec((C8, 1), lambda n, t: (0, 0)),             # beta column
        ],
        out_specs=pl.BlockSpec((None, C8, TP), lambda n, t: (n, 0, t)),
        compiler_params=pltpu.CompilerParams(
            dimension_semantics=("parallel", "parallel")),
        cost_estimate=cost,
    )(x3, gamma_b, beta_b)

    out = out[:, :C, :HW].reshape(N, C, H, W)             # free when no padding used
    return out


# ----------------------------- pure-JAX reference ------------------------------------


def gdn_reference(x, beta, gamma, inverse=False):
    ped = (2.0 ** -18) ** 2
    beta_eff = jnp.maximum(beta, (1e-6 + ped) ** 0.5) ** 2 - ped
    gamma_eff = jnp.maximum(gamma, ped ** 0.5) ** 2 - ped
    norm = jnp.einsum("ij,njhw->nihw", gamma_eff, x * x) + beta_eff[None, :, None, None]
    norm = jnp.sqrt(norm) if inverse else jax.lax.rsqrt(norm)
    return x * norm


# ----------------------------- main ---------------------------------------------------


if __name__ == "__main__":
    key = jax.random.PRNGKey(0)
    kx, kb, kg = jax.random.split(key, 3)

    N, C, H, W = 2, 8, 16, 16
    x = jax.random.normal(kx, (N, C, H, W), jnp.float32)

    # Raw parameters as GDN.__init__ constructs them (NonNegativeParametrizer.init of
    # ones / 0.1*eye), plus a small positive perturbation so the off-diagonal
    # channel-mixing matmul path is actually exercised.
    ped = (2.0 ** -18) ** 2
    beta_raw = jnp.sqrt(jnp.ones((C,), jnp.float32)
                        + 0.1 * jnp.abs(jax.random.normal(kb, (C,), jnp.float32)) + ped)
    gamma_raw = jnp.sqrt(0.1 * jnp.eye(C, dtype=jnp.float32)
                         + 0.02 * jnp.abs(jax.random.normal(kg, (C, C), jnp.float32)) + ped)

    # GDN (inverse=False)
    out = jax.block_until_ready(gdn_forward(x, beta_raw, gamma_raw))
    ref = jax.block_until_ready(gdn_reference(x, beta_raw, gamma_raw, inverse=False))
    assert out.shape == ref.shape == (N, C, H, W), (out.shape, ref.shape)
    max_err = float(jnp.max(jnp.abs(out - ref)))
    assert max_err < 5e-2, f"GDN max abs error too large: {max_err}"

    # IGDN (inverse=True)
    out_i = jax.block_until_ready(gdn_forward(x, beta_raw, gamma_raw, inverse=True))
    ref_i = jax.block_until_ready(gdn_reference(x, beta_raw, gamma_raw, inverse=True))
    max_err_i = float(jnp.max(jnp.abs(out_i - ref_i)))
    assert max_err_i < 5e-2, f"IGDN max abs error too large: {max_err_i}"

    print("KERNEL_OK")
</pallas_src>

<mosaic_0001>
module attributes {stable_mosaic.version = 11 : i64} {
  func.func @_gdn_kernel(%arg0: i32, %arg1: i32, %arg2: memref<1x8x256xf32, #tpu.memory_space<vmem>>, %arg3: memref<8x8xbf16, #tpu.memory_space<vmem>>, %arg4: memref<8x1xf32, #tpu.memory_space<vmem>>, %arg5: memref<1x8x256xf32, #tpu.memory_space<vmem>>) attributes {dimension_semantics = [#tpu.dimension_semantics<parallel>, #tpu.dimension_semantics<parallel>], iteration_bounds = array<i64: 2, 1>, scalar_prefetch = 0 : i64, scratch_operands = 0 : i64, tpu.core_type = #tpu.core_type<tc>, window_params = [{transform_indices = @transform_0, window_bounds = array<i64: 1, 8, 256>}, {pipeline_mode = #tpu.pipeline_mode<synchronous>, transform_indices = @transform_1, window_bounds = array<i64: 8, 8>}, {pipeline_mode = #tpu.pipeline_mode<synchronous>, transform_indices = @transform_2, window_bounds = array<i64: 8, 1>}, {transform_indices = @transform_3, window_bounds = array<i64: 1, 8, 256>}]} {
    %c0 = arith.constant 0 : index
    %c0_0 = arith.constant 0 : index
    %c0_1 = arith.constant 0 : index
    %0 = vector.load %arg2[%c0, %c0_0, %c0_1] : memref<1x8x256xf32, #tpu.memory_space<vmem>>, vector<1x8x256xf32>
    %1 = vector.shape_cast %0 : vector<1x8x256xf32> to vector<8x256xf32>
    %2 = arith.mulf %1, %1 : vector<8x256xf32>
    %3 = arith.truncf %2 : vector<8x256xf32> to vector<8x256xbf16>
    %c0_2 = arith.constant 0 : index
    %c0_3 = arith.constant 0 : index
    %4 = vector.load %arg3[%c0_2, %c0_3] : memref<8x8xbf16, #tpu.memory_space<vmem>>, vector<8x8xbf16>
    %cst = arith.constant dense<0.000000e+00> : vector<8x256xf32>
    %5 = tpu.matmul %4, %3, %cst {dimension_numbers = #tpu.dot_dimension_numbers<[1], [0], [0], [1], [0, 0, 1, 1], [], []>} : vector<8x8xbf16>, vector<8x256xbf16>, vector<8x256xf32> -> vector<8x256xf32>
    %c0_4 = arith.constant 0 : index
    %c0_5 = arith.constant 0 : index
    %6 = vector.load %arg4[%c0_4, %c0_5] : memref<8x1xf32, #tpu.memory_space<vmem>>, vector<8x1xf32>
    %7 = vector.broadcast %6 : vector<8x1xf32> to vector<8x256xf32>
    %8 = arith.addf %5, %7 : vector<8x256xf32>
    %9 = math.rsqrt %8 : vector<8x256xf32>
    %10 = arith.mulf %1, %9 : vector<8x256xf32>
    %c0_6 = arith.constant 0 : index
    %c0_7 = arith.constant 0 : index
    %c0_8 = arith.constant 0 : index
    %11 = vector.load %arg5[%c0_6, %c0_7, %c0_8] : memref<1x8x256xf32, #tpu.memory_space<vmem>>, vector<1x8x256xf32>
    %12 = vector.shape_cast %11 : vector<1x8x256xf32> to vector<8x256xf32>
    %13 = vector.shape_cast %10 : vector<8x256xf32> to vector<1x8x256xf32>
    tpu.vector_store %arg5[%c0_6, %c0_7, %c0_8], %13 {strides = array<i32>} : memref<1x8x256xf32, #tpu.memory_space<vmem>>, vector<1x8x256xf32>,
    return
  }
  func.func @transform_0(%arg0: i32, %arg1: i32) -> (i32, i32, i32) {
    %c0_i32 = arith.constant 0 : i32
    %c0_i32_0 = arith.constant 0 : i32
    return %arg0, %c0_i32, %arg1 : i32, i32, i32
  }
  func.func @transform_1(%arg0: i32, %arg1: i32) -> (i32, i32) {
    %c0_i32 = arith.constant 0 : i32
    %c0_i32_0 = arith.constant 0 : i32
    %c0_i32_1 = arith.constant 0 : i32
    return %c0_i32, %c0_i32_0 : i32, i32
  }
  func.func @transform_2(%arg0: i32, %arg1: i32) -> (i32, i32) {
    %c0_i32 = arith.constant 0 : i32
    %c0_i32_0 = arith.constant 0 : i32
    %c0_i32_1 = arith.constant 0 : i32
    return %c0_i32, %c0_i32_0 : i32, i32
  }
  func.func @transform_3(%arg0: i32, %arg1: i32) -> (i32, i32, i32) {
    %c0_i32 = arith.constant 0 : i32
    %c0_i32_0 = arith.constant 0 : i32
    return %arg0, %c0_i32, %arg1 : i32, i32, i32
  }
}

</mosaic_0001>

<llo_original>
// kernel: gdn_forward.1
$region0: #{gdn_forward.1}
  #allocation0 [shape = 'u32[]', space=smem, size = 0x4, offset = 0x4, fixed_abs, tag = 'smem constant byte address 0x4 - core index']
  #allocation1 [shape = 'u32[144,128]{1,0:T(1,128)}', space=vmem, size = 0x12000, scoped, tag = 'internal scratch']
  %s0 = inlined_call_operand.vmem [shape: f32[2,8,256], index: 0, kind: input, shape index: {}]
  %s1 = inlined_call_operand.vmem [shape: bf16[8,8], index: 1, kind: input, shape index: {}]
  %s2 = inlined_call_operand.vmem [shape: f32[8,1], index: 2, kind: input, shape index: {}]
  %s3 = inlined_call_operand.vmem [shape: f32[2,8,256], index: 3, kind: output, shape index: {}]
  %s4 = sld [smem:[#allocation0]]
  $region45: #{gdn_forward.1} parent=0
    _
  %s6 = ssub.s32 1, %s4
  %s7 = scalar_select 0, %s6, %s4
  loop: start=0, step=1, limit=4
  $region2: #{gdn_forward.1} parent=0 // loop_pre_header
    _
  $region3: #{gdn_forward.1} parent=0 // loop_header
    %s9 = sphi 0, %s13
    %p10 = scmp.ge.s32.totalorder %s9, 4
    %s16 = sphi 0, %s28
    %s17 = sphi 0, %s24
    %s18 = sphi 0, %s16
    %s19 = sphi 0, %s17
    %s20 = sphi 0, %s18
    %s21 = sphi 0, %s19
    %s33 = sphi 0, %s35
    %s36 = sphi 0, %s33
    %s37 = sphi 0, %s36
    %s53 = sphi 0, %s37
    %s57 = sphi 0, %s57
    %s59 = sphi 0, %s57
    %s60 = sphi 0, %s59
    %s74 = sphi 0, %s60
    %s78 = sphi 0, %s78
    %s80 = sphi 0, %s78
    %s81 = sphi 0, %s80
    %s95 = sphi 0, %s81
    %s103 = sphi 0, %s105
    %s106 = sphi 0, %s103
    %s107 = sphi 0, %s106
    %s123 = sphi 0, %s107
  $region4: #{gdn_forward.1} parent=0 // loop_header_branch
    %12 = sbr.rel (%p10) target = $region8
  $region5: #{gdn_forward.1} parent=0 // loop_body
    %s14 = ssub.s32 %s9, 1
    %s15 = ssub.s32 %s9, 2
    %s22 = sadd.s32 1, %s17
    %p23 = scmp.ge.s32.totalorder %s22, 1
    %s24 = scalar_select %p23, 0, %s22
    %s25 = sadd.s32 1, %s16
    %s26 = scalar_select %p23, %s25, %s16
    %p27 = scmp.ge.s32.totalorder %s26, 2
    %s28 = scalar_select %p27, 0, %s26
    %s29 = ssub.s32 %s16, %s28
    %s30 = ssub.s32 %s17, %s24
    %s31 = sor.u32 %s29, %s30
    %p32 = scmp.eq.s32.totalorder %s31, 0
    %s34 = sadd.s32 %s33, 1
    %s35 = scalar_select %p32, %s33, %s34
    %p38 = pneg %p32
    %p39 = scmp.eq.s32.totalorder %s9, 1
    %p40 = por %p38, %p39
    %p41 = scmp.ne.s32.totalorder %s33, %s36
    %p42 = scmp.eq.s32.totalorder %s9, 0
    %p43 = por %p41, %p42
    %p44 = scmp.ne.s32.totalorder %s33, %s36
    %p45 = scmp.eq.s32.totalorder %s14, 1
    %p46 = por %p44, %p45
    %p47 = scmp.ne.s32.totalorder %s36, %s37
    %p48 = scmp.eq.s32.totalorder %s14, 0
    %p49 = por %p47, %p48
    %p50 = scmp.ne.s32.totalorder %s36, %s37
    %p51 = scmp.eq.s32.totalorder %s15, 1
    %p52 = por %p50, %p51
    %p54 = scmp.ne.s32.totalorder %s37, %s53
    %p55 = scmp.eq.s32.totalorder %s15, 0
    %p56 = por %p54, %p55
    %s58 = sadd.s32 %s57, 1
    %p61 = scmp.eq.s32.totalorder %s9, 1
    %p62 = scmp.ne.s32.totalorder %s57, %s59
    %p63 = scmp.eq.s32.totalorder %s9, 0
    %p64 = por %p62, %p63
    %p65 = scmp.ne.s32.totalorder %s57, %s59
    %p66 = scmp.eq.s32.totalorder %s14, 1
    %p67 = por %p65, %p66
    %p68 = scmp.ne.s32.totalorder %s59, %s60
    %p69 = scmp.eq.s32.totalorder %s14, 0
    %p70 = por %p68, %p69
    %p71 = scmp.ne.s32.totalorder %s59, %s60
    %p72 = scmp.eq.s32.totalorder %s15, 1
    %p73 = por %p71, %p72
    %p75 = scmp.ne.s32.totalorder %s60, %s74
    %p76 = scmp.eq.s32.totalorder %s15, 0
    %p77 = por %p75, %p76
    %s79 = sadd.s32 %s78, 1
    %p82 = scmp.eq.s32.totalorder %s9, 1
    %p83 = scmp.ne.s32.totalorder %s78, %s80
    %p84 = scmp.eq.s32.totalorder %s9, 0
    %p85 = por %p83, %p84
    %p86 = scmp.ne.s32.totalorder %s78, %s80
    %p87 = scmp.eq.s32.totalorder %s14, 1
    %p88 = por %p86, %p87
    %p89 = scmp.ne.s32.totalorder %s80, %s81
    %p90 = scmp.eq.s32.totalorder %s14, 0
    %p91 = por %p89, %p90
    %p92 = scmp.ne.s32.totalorder %s80, %s81
    %p93 = scmp.eq.s32.totalorder %s15, 1
    %p94 = por %p92, %p93
    %p96 = scmp.ne.s32.totalorder %s81, %s95
    %p97 = scmp.eq.s32.totalorder %s15, 0
    %p98 = por %p96, %p97
    %s99 = ssub.s32 %s16, %s28
    %s100 = ssub.s32 %s17, %s24
    %s101 = sor.u32 %s99, %s100
    %p102 = scmp.eq.s32.totalorder %s101, 0
    %s104 = sadd.s32 %s103, 1
    %s105 = scalar_select %p102, %s103, %s104
    %p108 = pneg %p102
    %p109 = scmp.eq.s32.totalorder %s9, 1
    %p110 = por %p108, %p109
    %p111 = scmp.ne.s32.totalorder %s103, %s106
    %p112 = scmp.eq.s32.totalorder %s9, 0
    %p113 = por %p111, %p112
    %p114 = scmp.ne.s32.totalorder %s103, %s106
    %p115 = scmp.eq.s32.totalorder %s14, 1
    %p116 = por %p114, %p115
    %p117 = scmp.ne.s32.totalorder %s106, %s107
    %p118 = scmp.eq.s32.totalorder %s14, 0
    %p119 = por %p117, %p118
    %p120 = scmp.ne.s32.totalorder %s106, %s107
    %p121 = scmp.eq.s32.totalorder %s15, 1
    %p122 = por %p120, %p121
    %p124 = scmp.ne.s32.totalorder %s107, %s123
    %p125 = scmp.eq.s32.totalorder %s15, 0
    %p126 = por %p124, %p125
    %p127 = scmp.le.s32.totalorder 1, %s9
    %p128 = scmp.lt.s32.totalorder %s9, 3
    %p129 = pnand %p127, %p128
    %p130 = pneg %p129
    // Predicated region
    $region9: #{gdn_forward.1} parent=5 // pred_check
      _
    $region10: #{gdn_forward.1} parent=5 // pred_check_branch
      %132 = sbr.rel (%p129) target = $region12
    $region11: #{gdn_forward.1} parent=5 // pred_region
      %s133 = ssub.s32 %s9, 1
      // Predicated region
      $region13: #{gdn_forward.1} parent=11 // pred_check
        %p134 = pneg %p70
      $region14: #{gdn_forward.1} parent=11 // pred_check_branch
        %136 = sbr.rel (%p134) target = $region16
      $region15: #{gdn_forward.1} parent=11 // pred_region
        _
      $region16: #{gdn_forward.1} parent=11 // pred_fallthru
        _
      // Predicated region
      $region17: #{gdn_forward.1} parent=11 // pred_check
        %p137 = pneg %p91
      $region18: #{gdn_forward.1} parent=11 // pred_check_branch
        %139 = sbr.rel (%p137) target = $region20
      $region19: #{gdn_forward.1} parent=11 // pred_region
        _
      $region20: #{gdn_forward.1} parent=11 // pred_fallthru
        _
    $region12: #{gdn_forward.1} parent=5 // pred_fallthru
      _
    %p140 = scmp.lt.s32.totalorder %s9, 2
    // Predicated region
    $region21: #{gdn_forward.1} parent=5 // pred_check
      %p141 = pneg %p140
    $region22: #{gdn_forward.1} parent=5 // pred_check_branch
      %143 = sbr.rel (%p141) target = $region24
    $region23: #{gdn_forward.1} parent=5 // pred_region
      // Predicated region
      $region25: #{gdn_forward.1} parent=23 // pred_check
        %p144 = pneg %p43
      $region26: #{gdn_forward.1} parent=23 // pred_check_branch
        %146 = sbr.rel (%p144) target = $region28
      $region27: #{gdn_forward.1} parent=23 // pred_region
        %s147 = smul.u32 2, %s17
        %p148 = scmp.lt.s32.totalorder %s16, 1
        %s149 = scalar_select %p148, %s16, 1
        %p150 = scmp.lt.s32.totalorder %s147, 1
        %s151 = scalar_select %p150, %s147, 1
        %s152 = smul.addr %s149, 2
        %s153 = sadd.s32 %s151, %s152
        %s154 = smul.addr %s153, 8
        %s155 = scalar_lea.vmem %s0, %s154
        %s156 = smul.u32 2, %s17
      $region28: #{gdn_forward.1} parent=23 // pred_fallthru
        _
    $region24: #{gdn_forward.1} parent=5 // pred_fallthru
      _
    %p157 = scmp.le.s32.totalorder 1, %s9
    %p158 = scmp.lt.s32.totalorder %s9, 3
    %p159 = pnand %p157, %p158
    %p160 = pneg %p159
    // Predicated region
    $region29: #{gdn_forward.1} parent=5 // pred_check
      _
    $region30: #{gdn_forward.1} parent=5 // pred_check_branch
      %162 = sbr.rel (%p159) target = $region32
    $region31: #{gdn_forward.1} parent=5 // pred_region
      %s163 = ssub.s32 %s9, 1
      %s164 = smul.u32 2, %s19
      %p165 = scmp.lt.s32.totalorder %s18, 1
      %s166 = scalar_select %p165, %s18, 1
      %p167 = scmp.lt.s32.totalorder %s164, 1
      %s168 = scalar_select %p167, %s164, 1
      %s169 = smul.addr %s166, 2
      %s170 = sadd.s32 %s168, %s169
      %s171 = smul.addr %s170, 8
      %s172 = scalar_lea.vmem %s0, %s171
      %p173 = pneg %p49
      %p174 = pneg %p46
      %p175 = pneg %p70
      %p176 = pneg %p67
      %p177 = pneg %p91
      %p178 = pneg %p88
      %p179 = pneg %p119
      %p180 = pneg %p116
      %s181 = smul.u32 2, %s19
      %p182 = scmp.lt.s32.totalorder %s18, 1
      %s183 = scalar_select %p182, %s18, 1
      %p184 = scmp.lt.s32.totalorder %s181, 1
      %s185 = scalar_select %p184, %s181, 1
      %s186 = smul.addr %s183, 2
      %s187 = sadd.s32 %s185, %s186
      %s188 = smul.addr %s187, 8
      %s189 = scalar_lea.vmem %s3, %s188
      %s190 = smul.u32 2, %s19
      %p191 = scmp.lt.s32.totalorder %s18, 1
      %s192 = scalar_select %p191, %s18, 1
      %p193 = scmp.lt.s32.totalorder %s190, 1
      %s194 = scalar_select %p193, %s190, 1
      %s195 = smul.addr %s192, 2
      %s196 = sadd.s32 %s194, %s195
      %s197 = smul.addr %s196, 8
      %s198 = scalar_lea.vmem %s0, %s197
      %s199 = smul.u32 2, %s19
      %s200 = smul.u32 2, %s19
      %p201 = scmp.lt.s32.totalorder %s18, 1
      %s202 = scalar_select %p201, %s18, 1
      %p203 = scmp.lt.s32.totalorder %s200, 1
      %s204 = scalar_select %p203, %s200, 1
      %s205 = smul.addr %s202, 2
      %s206 = sadd.s32 %s204, %s205
      %s207 = smul.addr %s206, 8
      %s208 = scalar_lea.vmem %s3, %s207
      %s209 = smul.u32 2, %s19
      %v211 = vld [vmem:[%s198] sm:$0xff]
      %v212 = vld [vmem:[%s198 + $0x8] sm:$0xff]
      %v213 = vmul.f32 %v211, %v211
      %v214 = vmul.f32 %v212, %v212
      %v215 = vpack.c.bf16 %v213, %v213
      %v216 = vpack.c.bf16 %v214, %v214
      %v217 = vld [vmem:[%s1] sm:$0xf]
      %v218 = vld [vmem:[%s2] sm:$0xff]
      %220 = vset.pattern.permute.xlu0 0
      %221 = vperm.xlu0 %220, %v218
      %v222 = vpop.permute.xlu0 %221
      %vm224 = vcmask 64512
      %v226 = vsel %vm224, %v217, 0
      %vm228 = vcmask 1043456
      %v230 = vsel %vm228, %v215, 0
      %v233 = vsel %vm228, %v216, 0
      %235 = vmatprep.subr.bf16.mxu0 %v233
      %236 = vmatpush1.bf16.msra.mxu0 %v230
      %237 = vmatprep.subr.bf16.mxu0 0
      %238 = vmatpush1.bf16.msra.mxu0 0
      %239 = vmatprep.subr.bf16.mxu0 0
      %240 = vmatpush1.bf16.msra.mxu0 0
      %241 = vmatprep.subr.bf16.mxu0 0
      %242 = vmatpush1.bf16.msra.mxu0 0
      %243 = vmatprep.subr.bf16.mxu0 0
      %244 = vmatpush1.bf16.msra.mxu0 0
      %245 = vmatprep.subr.bf16.mxu0 0
      %246 = vmatpush1.bf16.msra.mxu0 0
      %247 = vmatprep.subr.bf16.mxu0 0
      %248 = vmatpush1.bf16.msra.mxu0 0
      %249 = vmatprep.subr.bf16.mxu0 0
      %250 = vmatpush1.bf16.msra.mxu0 0
      %251 = vmatprep.subr.bf16.mxu0 0
      %252 = vmatpush1.bf16.msra.mxu0 0
      %253 = vmatprep.subr.bf16.mxu0 0
      %254 = vmatpush1.bf16.msra.mxu0 0
      %255 = vmatprep.subr.bf16.mxu0 0
      %256 = vmatpush1.bf16.msra.mxu0 0
      %257 = vmatprep.subr.bf16.mxu0 0
      %258 = vmatpush1.bf16.msra.mxu0 0
      %259 = vmatprep.subr.bf16.mxu0 0
      %260 = vmatpush1.bf16.msra.mxu0 0
      %261 = vmatprep.subr.bf16.mxu0 0
      %262 = vmatpush1.bf16.msra.mxu0 0
      %263 = vmatprep.subr.bf16.mxu0 0
      %264 = vmatpush1.bf16.msra.mxu0 0
      %265 = vmatprep.subr.bf16.mxu0 0
      %266 = vmatpush1.bf16.msra.mxu0 0
      %267 = vmatprep.mubr.bf16.mxu0 0
      %268 = vmatmul.mubr.bf16.gmra.mrb[0].mxu0 %v226
      %v269 = vpop.f32.mrb[0].mxu0
      %v270 = vadd.f32 %v222, %v269
      %v271 = vpop.f32.mrb[0].mxu0
      %v272 = vadd.f32 %v222, %v271
      %v273 = vpop.f32.mrb[0].mxu0
      %v274 = vpop.f32.mrb[0].mxu0
      %275 = vdwg.mxu0
      %v276 = vrsqrt.pop %v270
      %v277 = vrsqrt.pop %v272
      %v278 = vmul.f32 %v211, %v276
      %v279 = vmul.f32 %v212, %v277
      %280 = vst [vmem:[%s208] sm:$0xff] %v278
      %281 = vst [vmem:[%s208 + $0x8] sm:$0xff] %v279
      %s282 = smul.u32 2, %s19
      %p283 = scmp.lt.s32.totalorder %s18, 1
      %s284 = scalar_select %p283, %s18, 1
      %p285 = scmp.lt.s32.totalorder %s282, 1
      %s286 = scalar_select %p285, %s282, 1
      %s287 = smul.addr %s284, 2
      %s288 = sadd.s32 %s286, %s287
      %s289 = smul.addr %s288, 8
      %s290 = scalar_lea.vmem %s3, %s289
      // Predicated region
      $region33: #{gdn_forward.1} parent=31 // pred_check
        %p291 = pneg %p116
      $region34: #{gdn_forward.1} parent=31 // pred_check_branch
        %293 = sbr.rel (%p291) target = $region36
      $region35: #{gdn_forward.1} parent=31 // pred_region
        %s294 = smul.u32 2, %s19
      $region36: #{gdn_forward.1} parent=31 // pred_fallthru
        _
    $region32: #{gdn_forward.1} parent=5 // pred_fallthru
      _
    %p295 = scmp.le.s32.totalorder 2, %s9
    // Predicated region
    $region37: #{gdn_forward.1} parent=5 // pred_check
      %p296 = pneg %p295
    $region38: #{gdn_forward.1} parent=5 // pred_check_branch
      %298 = sbr.rel (%p296) target = $region40
    $region39: #{gdn_forward.1} parent=5 // pred_region
      %s299 = ssub.s32 %s9, 2
      // Predicated region
      $region41: #{gdn_forward.1} parent=39 // pred_check
        %p300 = pneg %p122
      $region42: #{gdn_forward.1} parent=39 // pred_check_branch
        %302 = sbr.rel (%p300) target = $region44
      $region43: #{gdn_forward.1} parent=39 // pred_region
        %s303 = smul.u32 2, %s21
        %p304 = scmp.lt.s32.totalorder %s20, 1
        %s305 = scalar_select %p304, %s20, 1
        %p306 = scmp.lt.s32.totalorder %s303, 1
        %s307 = scalar_select %p306, %s303, 1
        %s308 = smul.addr %s305, 2
        %s309 = sadd.s32 %s307, %s308
        %s310 = smul.addr %s309, 8
        %s311 = scalar_lea.vmem %s3, %s310
      $region44: #{gdn_forward.1} parent=39 // pred_fallthru
        _
    $region40: #{gdn_forward.1} parent=5 // pred_fallthru
      _
  $region6: #{gdn_forward.1} parent=0 // loop_footer
    %s13 = sadd.s32 1, %s9
  $region7: #{gdn_forward.1} parent=0 // loop_footer_branch
    %8 = sbr.rel target = $region3
  $region8: #{gdn_forward.1} parent=0 // loop_exit
    _

</llo_original>
